<compile_context>
chip_gen: v7x
topology: tpu7x:2x2x1
jax: 0.10.0
libtpu: 0.0.40
codegen_flags: <defaults>
</compile_context>

<pallas_src>
import functools

import jax
import jax.numpy as jnp
from jax.experimental import pallas as pl
from jax.experimental.pallas import tpu as pltpu


_SPLITS = 2                       # leading "parallel" grid axis (2 TCs on v7x,
                                  # harmless serial loop on v5e/v6e)
_VMEM_LIMIT = 32 * 1024 * 1024    # scoped VMEM limit, safe on v5e/v6e/v7x
_TILE_BUDGET = 16 * 1024 * 1024   # budget for double-buffered input tiles


def _row_mask(c, i, tile_n, tiles_per_split, n_rows):
    """True for rows that belong to the real (unpadded) batch."""
    row0 = (c * tiles_per_split + i) * tile_n
    rows = row0 + jax.lax.broadcasted_iota(jnp.int32, (tile_n, 1), 0)
    return rows < n_rows


# ----------------------------------------------------------------------------
# Kernel 1: negative is None
#   loss = mean(1 - cosine_similarity(anchor, positive, dim=1, eps=1e-8))
#   Kernel accumulates sum(cos) per split; wrapper computes 1 - total / N.
# ----------------------------------------------------------------------------
def _cosine_partial_kernel(a_ref, p_ref, o_ref, *, n_rows, tile_n,
                           tiles_per_split):
    c = pl.program_id(0)
    i = pl.program_id(1)

    @pl.when(i == 0)
    def _():
        o_ref[...] = jnp.zeros_like(o_ref)

    a = a_ref[...].astype(jnp.float32)
    p = p_ref[...].astype(jnp.float32)

    # PyTorch clamps each norm with eps=1e-8:
    #   max(sqrt(x), eps) == sqrt(max(x, eps^2))  ->  rsqrt(max(x, eps^2))
    eps2 = jnp.float32(1e-8) * jnp.float32(1e-8)

    dot = jnp.sum(a * p, axis=-1, keepdims=True)          # (TILE_N, 1)
    na2 = jnp.sum(a * a, axis=-1, keepdims=True)
    np2 = jnp.sum(p * p, axis=-1, keepdims=True)
    cos = (dot
           * jax.lax.rsqrt(jnp.maximum(na2, eps2))
           * jax.lax.rsqrt(jnp.maximum(np2, eps2)))

    mask = _row_mask(c, i, tile_n, tiles_per_split, n_rows)
    cos = jnp.where(mask, cos, jnp.float32(0.0))

    partial = jnp.sum(cos, axis=0, keepdims=True)          # (1, 1)
    o_ref[...] += jnp.broadcast_to(partial, o_ref.shape)   # (1, 128) lane-dense


# ----------------------------------------------------------------------------
# Kernel 2: triplet mode
#   pos_dist = || a - p + eps ||_2   (eps = 1e-6, F.pairwise_distance default)
#   neg_dist = || a - n + eps ||_2
#   Kernel accumulates sum(pos_dist + relu(margin - neg_dist)) per split;
#   wrapper divides by N.
# ----------------------------------------------------------------------------
def _triplet_partial_kernel(a_ref, p_ref, n_ref, o_ref, *, margin, n_rows,
                            d_valid, tile_n, tiles_per_split):
    c = pl.program_id(0)
    i = pl.program_id(1)

    @pl.when(i == 0)
    def _():
        o_ref[...] = jnp.zeros_like(o_ref)

    a = a_ref[...].astype(jnp.float32)
    p = p_ref[...].astype(jnp.float32)
    ng = n_ref[...].astype(jnp.float32)
    eps = jnp.float32(1e-6)

    dp = a - p + eps
    dn = a - ng + eps

    d_pad = a.shape[-1]
    if d_pad != d_valid:
        # Zero-padded feature lanes would otherwise contribute eps^2 each.
        lane = jax.lax.broadcasted_iota(jnp.int32, (1, d_pad), 1)
        lane_mask = (lane < d_valid).astype(jnp.float32)
        dp = dp * lane_mask
        dn = dn * lane_mask

    pos_dist = jnp.sqrt(jnp.sum(dp * dp, axis=-1, keepdims=True))  # (TILE_N, 1)
    neg_dist = jnp.sqrt(jnp.sum(dn * dn, axis=-1, keepdims=True))
    hinge = jnp.maximum(jnp.float32(margin) - neg_dist, jnp.float32(0.0))
    per_row = pos_dist + hinge

    mask = _row_mask(c, i, tile_n, tiles_per_split, n_rows)
    per_row = jnp.where(mask, per_row, jnp.float32(0.0))

    partial = jnp.sum(per_row, axis=0, keepdims=True)       # (1, 1)
    o_ref[...] += jnp.broadcast_to(partial, o_ref.shape)    # (1, 128)


# ----------------------------------------------------------------------------
# Wrapper (mirrors ContrastiveLoss.forward)
# ----------------------------------------------------------------------------
def _pick_tile_n(n_rows, d_pad, n_inputs):
    per_row = n_inputs * 2 * d_pad * 4        # inputs x double-buffer x f32
    t = _TILE_BUDGET // per_row
    t = min(t, 2048)                          # bigger tiles stop paying off
    t = min(t, ((n_rows + 7) // 8) * 8)       # no larger than row-aligned batch
    return max(8, (t // 8) * 8)


def contrastive_loss(anchor, positive, negative=None, *, margin=0.5):
    anchor = jnp.asarray(anchor, jnp.float32)
    positive = jnp.asarray(positive, jnp.float32)
    assert anchor.ndim == 2 and anchor.shape == positive.shape
    n, d = anchor.shape
    n_inputs = 2 if negative is None else 3

    d_pad = ((d + 127) // 128) * 128
    tile_n = _pick_tile_n(n, d_pad, n_inputs)
    tiles_per_split = pl.cdiv(n, _SPLITS * tile_n)
    n_pad = _SPLITS * tiles_per_split * tile_n

    def prep(x):
        x = jnp.asarray(x, jnp.float32)
        if (n_pad, d_pad) != (n, d):
            x = jnp.pad(x, ((0, n_pad - n), (0, d_pad - d)))
        return x

    in_spec = pl.BlockSpec((tile_n, d_pad),
                           lambda c, i: (c * tiles_per_split + i, 0))
    # One lane-dense (1, 128) partial-sum block per split (per TensorCore).
    out_spec = pl.BlockSpec((1, 128), lambda c, i: (0, c))
    out_shape = jax.ShapeDtypeStruct((1, 128 * _SPLITS), jnp.float32)
    compiler_params = pltpu.CompilerParams(
        dimension_semantics=("parallel", "arbitrary"),
        vmem_limit_bytes=_VMEM_LIMIT)

    if negative is None:
        kernel = functools.partial(
            _cosine_partial_kernel, n_rows=n, tile_n=tile_n,
            tiles_per_split=tiles_per_split)
        cost = pl.CostEstimate(flops=6 * n_pad * d_pad,
                               transcendentals=2 * n_pad,
                               bytes_accessed=2 * n_pad * d_pad * 4)
        out = pl.pallas_call(
            kernel,
            grid=(_SPLITS, tiles_per_split),
            in_specs=[in_spec, in_spec],
            out_specs=out_spec,
            out_shape=out_shape,
            compiler_params=compiler_params,
            cost_estimate=cost,
        )(prep(anchor), prep(positive))
        total = jnp.sum(out.reshape(_SPLITS, 128)[:, 0])
        return jnp.float32(1.0) - total / jnp.float32(n)

    assert negative.shape == anchor.shape
    kernel = functools.partial(
        _triplet_partial_kernel, margin=float(margin), n_rows=n, d_valid=d,
        tile_n=tile_n, tiles_per_split=tiles_per_split)
    cost = pl.CostEstimate(flops=9 * n_pad * d_pad,
                           transcendentals=2 * n_pad,
                           bytes_accessed=3 * n_pad * d_pad * 4)
    out = pl.pallas_call(
        kernel,
        grid=(_SPLITS, tiles_per_split),
        in_specs=[in_spec, in_spec, in_spec],
        out_specs=out_spec,
        out_shape=out_shape,
        compiler_params=compiler_params,
        cost_estimate=cost,
    )(prep(anchor), prep(positive), prep(negative))
    total = jnp.sum(out.reshape(_SPLITS, 128)[:, 0])
    return total / jnp.float32(n)


if __name__ == "__main__":
    key = jax.random.PRNGKey(0)
    k1, k2, k3 = jax.random.split(key, 3)

    N, D = 8, 32  # small batch of embedding vectors
    anchor = jax.random.normal(k1, (N, D), dtype=jnp.float32)
    positive = jax.random.normal(k2, (N, D), dtype=jnp.float32)
    negative = jax.random.normal(k3, (N, D), dtype=jnp.float32)

    # Mode 1: negative is None -> mean(1 - cosine_similarity)
    loss_cos = contrastive_loss(anchor, positive)
    # Mode 2: triplet -> mean(pos_dist + relu(margin - neg_dist))
    loss_tri = contrastive_loss(anchor, positive, negative, margin=0.5)
    jax.block_until_ready((loss_cos, loss_tri))

    # Pure-jnp reference (same formulas as the PyTorch module) — sanity check.
    def ref_cos(a, p):
        eps = 1e-8
        na = jnp.maximum(jnp.linalg.norm(a, axis=1), eps)
        npp = jnp.maximum(jnp.linalg.norm(p, axis=1), eps)
        cos = jnp.sum(a * p, axis=1) / (na * npp)
        return jnp.mean(1.0 - cos)

    def ref_tri(a, p, ng, m=0.5):
        pd = jnp.linalg.norm(a - p + 1e-6, axis=1)
        nd = jnp.linalg.norm(a - ng + 1e-6, axis=1)
        return jnp.mean(pd + jnp.maximum(m - nd, 0.0))

    assert jnp.allclose(loss_cos, ref_cos(anchor, positive),
                        rtol=1e-5, atol=1e-5)
    assert jnp.allclose(loss_tri, ref_tri(anchor, positive, negative),
                        rtol=1e-5, atol=1e-5)

    print("KERNEL_OK")
</pallas_src>

<mosaic_0001>
module attributes {stable_mosaic.version = 11 : i64} {
  func.func @_cosine_partial_kernel(%arg0: i32, %arg1: i32, %arg2: memref<8x128xf32, #tpu.memory_space<vmem>>, %arg3: memref<8x128xf32, #tpu.memory_space<vmem>>, %arg4: memref<1x128xf32, #tpu.memory_space<vmem>>) attributes {dimension_semantics = [#tpu.dimension_semantics<parallel>, #tpu.dimension_semantics<arbitrary>], iteration_bounds = array<i64: 2, 1>, scalar_prefetch = 0 : i64, scratch_operands = 0 : i64, tpu.core_type = #tpu.core_type<tc>, window_params = [{transform_indices = @transform_0, window_bounds = array<i64: 8, 128>}, {transform_indices = @transform_1, window_bounds = array<i64: 8, 128>}, {transform_indices = @transform_2, window_bounds = array<i64: 1, 128>}]} {
    %c0_i32 = arith.constant 0 : i32
    %0 = arith.cmpi eq, %arg1, %c0_i32 : i32
    %1 = arith.extui %0 : i1 to i32
    %c0_i32_0 = arith.constant 0 : i32
    %2 = arith.cmpi ne, %1, %c0_i32_0 : i32
    scf.if %2 {
      %cst_15 = arith.constant 0.000000e+00 : f32
      %40 = vector.broadcast %cst_15 : f32 to vector<1x128xf32>
      %c0_16 = arith.constant 0 : index
      %c0_17 = arith.constant 0 : index
      %41 = vector.load %arg4[%c0_16, %c0_17] : memref<1x128xf32, #tpu.memory_space<vmem>>, vector<1x128xf32>
      tpu.vector_store %arg4[%c0_16, %c0_17], %40 {strides = array<i32>} : memref<1x128xf32, #tpu.memory_space<vmem>>, vector<1x128xf32>,
    } else {
    }
    %c0 = arith.constant 0 : index
    %c0_1 = arith.constant 0 : index
    %3 = vector.load %arg2[%c0, %c0_1] : memref<8x128xf32, #tpu.memory_space<vmem>>, vector<8x128xf32>
    %c0_2 = arith.constant 0 : index
    %c0_3 = arith.constant 0 : index
    %4 = vector.load %arg3[%c0_2, %c0_3] : memref<8x128xf32, #tpu.memory_space<vmem>>, vector<8x128xf32>
    %cst = arith.constant 9.99999993E-9 : f32
    %cst_4 = arith.constant 9.99999993E-9 : f32
    %5 = arith.mulf %cst, %cst_4 : f32
    %6 = arith.mulf %3, %4 : vector<8x128xf32>
    %cst_5 = arith.constant dense<0.000000e+00> : vector<8xf32>
    %7 = vector.multi_reduction <add>, %6, %cst_5 [1] : vector<8x128xf32> to vector<8xf32>
    %8 = vector.shape_cast %7 : vector<8xf32> to vector<8x1xf32>
    %9 = arith.mulf %3, %3 : vector<8x128xf32>
    %cst_6 = arith.constant dense<0.000000e+00> : vector<8xf32>
    %10 = vector.multi_reduction <add>, %9, %cst_6 [1] : vector<8x128xf32> to vector<8xf32>
    %11 = vector.shape_cast %10 : vector<8xf32> to vector<8x1xf32>
    %12 = arith.mulf %4, %4 : vector<8x128xf32>
    %cst_7 = arith.constant dense<0.000000e+00> : vector<8xf32>
    %13 = vector.multi_reduction <add>, %12, %cst_7 [1] : vector<8x128xf32> to vector<8xf32>
    %14 = vector.shape_cast %13 : vector<8xf32> to vector<8x1xf32>
    %15 = vector.broadcast %5 : f32 to vector<8x1xf32>
    %16 = arith.maximumf %11, %15 : vector<8x1xf32>
    %17 = math.rsqrt %16 : vector<8x1xf32>
    %18 = arith.mulf %8, %17 : vector<8x1xf32>
    %19 = vector.broadcast %5 : f32 to vector<8x1xf32>
    %20 = arith.maximumf %14, %19 : vector<8x1xf32>
    %21 = math.rsqrt %20 : vector<8x1xf32>
    %22 = arith.mulf %18, %21 : vector<8x1xf32>
    %c1_i32 = arith.constant 1 : i32
    %23 = arith.muli %arg0, %c1_i32 : i32
    %24 = arith.addi %23, %arg1 : i32
    %c8_i32 = arith.constant 8 : i32
    %25 = arith.muli %24, %c8_i32 : i32
    %26 = tpu.iota {dimensions = array<i32: 0>} : vector<8x1xi32>
    %27 = vector.broadcast %25 : i32 to vector<8x1xi32>
    %28 = arith.addi %27, %26 : vector<8x1xi32>
    %c8_i32_8 = arith.constant 8 : i32
    %29 = vector.broadcast %c8_i32_8 : i32 to vector<8x1xi32>
    %30 = arith.cmpi slt, %28, %29 : vector<8x1xi32>
    %cst_9 = arith.constant 0.000000e+00 : f32
    %31 = vector.broadcast %cst_9 : f32 to vector<8x1xf32>
    %32 = arith.select %30, %22, %31 : vector<8x1xi1>, vector<8x1xf32>
    %cst_10 = arith.constant dense<0.000000e+00> : vector<1xf32>
    %33 = vector.multi_reduction <add>, %32, %cst_10 [0] : vector<8x1xf32> to vector<1xf32>
    %34 = vector.shape_cast %33 : vector<1xf32> to vector<1x1xf32>
    %c0_11 = arith.constant 0 : index
    %c0_12 = arith.constant 0 : index
    %35 = vector.load %arg4[%c0_11, %c0_12] : memref<1x128xf32, #tpu.memory_space<vmem>>, vector<1x128xf32>
    %36 = vector.shape_cast %34 : vector<1x1xf32> to vector<1x1xf32>
    %37 = vector.broadcast %36 : vector<1x1xf32> to vector<1x128xf32>
    %38 = arith.addf %35, %37 : vector<1x128xf32>
    %c0_13 = arith.constant 0 : index
    %c0_14 = arith.constant 0 : index
    %39 = vector.load %arg4[%c0_13, %c0_14] : memref<1x128xf32, #tpu.memory_space<vmem>>, vector<1x128xf32>
    tpu.vector_store %arg4[%c0_13, %c0_14], %38 {strides = array<i32>} : memref<1x128xf32, #tpu.memory_space<vmem>>, vector<1x128xf32>,
    return
  }
  func.func @transform_0(%arg0: i32, %arg1: i32) -> (i32, i32) {
    %c1_i32 = arith.constant 1 : i32
    %0 = arith.muli %arg0, %c1_i32 : i32
    %1 = arith.addi %0, %arg1 : i32
    %c0_i32 = arith.constant 0 : i32
    %c0_i32_0 = arith.constant 0 : i32
    return %1, %c0_i32 : i32, i32
  }
  func.func @transform_1(%arg0: i32, %arg1: i32) -> (i32, i32) {
    %c1_i32 = arith.constant 1 : i32
    %0 = arith.muli %arg0, %c1_i32 : i32
    %1 = arith.addi %0, %arg1 : i32
    %c0_i32 = arith.constant 0 : i32
    %c0_i32_0 = arith.constant 0 : i32
    return %1, %c0_i32 : i32, i32
  }
  func.func @transform_2(%arg0: i32, %arg1: i32) -> (i32, i32) {
    %c0_i32 = arith.constant 0 : i32
    %c0_i32_0 = arith.constant 0 : i32
    return %c0_i32, %arg0 : i32, i32
  }
}

</mosaic_0001>

<llo_original>
// kernel: tpu_custom_call.1
$region0: #{tpu_custom_call.1}
  #allocation0 [shape = 'u32[]', space=smem, size = 0x4, offset = 0x4, fixed_abs, tag = 'smem constant byte address 0x4 - core index']
  #allocation1 [shape = 'u32[144,128]{1,0:T(1,128)}', space=vmem, size = 0x12000, scoped, tag = 'internal scratch']
  %s0 = inlined_call_operand.hbm [shape: f32[16,128], index: 0, kind: input, shape index: {}]
  %s1 = inlined_call_operand.hbm [shape: f32[16,128], index: 1, kind: input, shape index: {}]
  %s2 = inlined_call_operand.hbm [shape: f32[1,256], index: 2, kind: output, shape index: {}]
  %s3 = sld [smem:[#allocation0]]
  $region53: #{tpu_custom_call.1} parent=0
    _
  %s5 = ssub.s32 1, %s3
  %s6 = scalar_select 0, %s5, %s3
  $region1: #{tpu_custom_call.1} parent=0
    #allocation2 [shape = 'u8[8192]{0}', space=vmem, size = 0x2000, scoped, tag = 'input window, operand 0']
    #allocation3 [shape = 's32[2]{0}', space=sflag, size = 0x8, scoped, tag = 'scoped memory for tpu_custom_call.1']
    #allocation4 [shape = 's32[2]{0}', space=sflag, size = 0x8, scoped, tag = 'scoped memory for tpu_custom_call.1']
    #allocation5 [shape = 'u8[8192]{0}', space=vmem, size = 0x2000, scoped, tag = 'input window, operand 1']
    #allocation6 [shape = 's32[2]{0}', space=sflag, size = 0x8, scoped, tag = 'scoped memory for tpu_custom_call.1']
    #allocation7 [shape = 'u8[1024]{0}', space=vmem, size = 0x400, scoped, tag = 'output window, operand 0']
    %7 = vsyncpa [#allocation3], 0
    %s8 = scalar_lea.sflag [#allocation3], 1
    %9 = vsyncpa %s8, 0
    %10 = vsyncpa [#allocation6], 0
    %s11 = scalar_lea.sflag [#allocation6], 1
    %12 = vsyncpa %s11, 0
    %13 = vsyncpa [#allocation4], 0
    %s14 = scalar_lea.sflag [#allocation4], 1
    %15 = vsyncpa %s14, 0
    loop: start=0, step=1, limit=4
    $region2: #{tpu_custom_call.1} parent=1 // loop_pre_header
      _
    $region3: #{tpu_custom_call.1} parent=1 // loop_header
      %s17 = sphi 0, %s21
      %p18 = scmp.ge.s32.totalorder %s17, 4
      %s24 = sphi 0, %s36
      %s25 = sphi 0, %s32
      %s26 = sphi 0, %s24
      %s27 = sphi 0, %s25
      %s28 = sphi 0, %s26
      %s29 = sphi 0, %s27
      %s41 = sphi 0, %s43
      %s44 = sphi 0, %s41
      %s45 = sphi 0, %s44
      %s61 = sphi 0, %s45
      %s69 = sphi 0, %s71
      %s72 = sphi 0, %s69
      %s73 = sphi 0, %s72
      %s89 = sphi 0, %s73
      %s95 = sphi 0, %s97
      %s98 = sphi 0, %s95
      %s99 = sphi 0, %s98
      %s115 = sphi 0, %s99
    $region4: #{tpu_custom_call.1} parent=1 // loop_header_branch
      %20 = sbr.rel (%p18) target = $region8
    $region5: #{tpu_custom_call.1} parent=1 // loop_body
      %s22 = ssub.s32 %s17, 1
      %s23 = ssub.s32 %s17, 2
      %s30 = sadd.s32 1, %s25
      %p31 = scmp.ge.s32.totalorder %s30, 1
      %s32 = scalar_select %p31, 0, %s30
      %s33 = sadd.s32 1, %s24
      %s34 = scalar_select %p31, %s33, %s24
      %p35 = scmp.ge.s32.totalorder %s34, 2
      %s36 = scalar_select %p35, 0, %s34
      %s37 = sadd.s32 %s24, %s25
      %s38 = sadd.s32 %s36, %s32
      %s39 = ssub.s32 %s37, %s38
      %p40 = scmp.eq.s32.totalorder %s39, 0
      %s42 = sadd.s32 %s41, 1
      %s43 = scalar_select %p40, %s41, %s42
      %p46 = pneg %p40
      %p47 = scmp.eq.s32.totalorder %s17, 1
      %p48 = por %p46, %p47
      %p49 = scmp.ne.s32.totalorder %s41, %s44
      %p50 = scmp.eq.s32.totalorder %s17, 0
      %p51 = por %p49, %p50
      %p52 = scmp.ne.s32.totalorder %s41, %s44
      %p53 = scmp.eq.s32.totalorder %s22, 1
      %p54 = por %p52, %p53
      %p55 = scmp.ne.s32.totalorder %s44, %s45
      %p56 = scmp.eq.s32.totalorder %s22, 0
      %p57 = por %p55, %p56
      %p58 = scmp.ne.s32.totalorder %s44, %s45
      %p59 = scmp.eq.s32.totalorder %s23, 1
      %p60 = por %p58, %p59
      %p62 = scmp.ne.s32.totalorder %s45, %s61
      %p63 = scmp.eq.s32.totalorder %s23, 0
      %p64 = por %p62, %p63
      %s65 = sadd.s32 %s24, %s25
      %s66 = sadd.s32 %s36, %s32
      %s67 = ssub.s32 %s65, %s66
      %p68 = scmp.eq.s32.totalorder %s67, 0
      %s70 = sadd.s32 %s69, 1
      %s71 = scalar_select %p68, %s69, %s70
      %p74 = pneg %p68
      %p75 = scmp.eq.s32.totalorder %s17, 1
      %p76 = por %p74, %p75
      %p77 = scmp.ne.s32.totalorder %s69, %s72
      %p78 = scmp.eq.s32.totalorder %s17, 0
      %p79 = por %p77, %p78
      %p80 = scmp.ne.s32.totalorder %s69, %s72
      %p81 = scmp.eq.s32.totalorder %s22, 1
      %p82 = por %p80, %p81
      %p83 = scmp.ne.s32.totalorder %s72, %s73
      %p84 = scmp.eq.s32.totalorder %s22, 0
      %p85 = por %p83, %p84
      %p86 = scmp.ne.s32.totalorder %s72, %s73
      %p87 = scmp.eq.s32.totalorder %s23, 1
      %p88 = por %p86, %p87
      %p90 = scmp.ne.s32.totalorder %s73, %s89
      %p91 = scmp.eq.s32.totalorder %s23, 0
      %p92 = por %p90, %p91
      %s93 = ssub.s32 %s24, %s36
      %p94 = scmp.eq.s32.totalorder %s93, 0
      %s96 = sadd.s32 %s95, 1
      %s97 = scalar_select %p94, %s95, %s96
      %p100 = pneg %p94
      %p101 = scmp.eq.s32.totalorder %s17, 1
      %p102 = por %p100, %p101
      %p103 = scmp.ne.s32.totalorder %s95, %s98
      %p104 = scmp.eq.s32.totalorder %s17, 0
      %p105 = por %p103, %p104
      %p106 = scmp.ne.s32.totalorder %s95, %s98
      %p107 = scmp.eq.s32.totalorder %s22, 1
      %p108 = por %p106, %p107
      %p109 = scmp.ne.s32.totalorder %s98, %s99
      %p110 = scmp.eq.s32.totalorder %s22, 0
      %p111 = por %p109, %p110
      %p112 = scmp.ne.s32.totalorder %s98, %s99
      %p113 = scmp.eq.s32.totalorder %s23, 1
      %p114 = por %p112, %p113
      %p116 = scmp.ne.s32.totalorder %s99, %s115
      %p117 = scmp.eq.s32.totalorder %s23, 0
      %p118 = por %p116, %p117
      %p119 = scmp.le.s32.totalorder 1, %s17
      %p120 = scmp.lt.s32.totalorder %s17, 3
      %p121 = pnand %p119, %p120
      %p122 = pneg %p121
      // Predicated region
      $region9: #{tpu_custom_call.1} parent=5 // pred_check
        _
      $region10: #{tpu_custom_call.1} parent=5 // pred_check_branch
        %124 = sbr.rel (%p121) target = $region12
      $region11: #{tpu_custom_call.1} parent=5 // pred_region
        %s125 = ssub.s32 %s17, 1
      $region12: #{tpu_custom_call.1} parent=5 // pred_fallthru
        _
      %p126 = scmp.lt.s32.totalorder %s17, 2
      // Predicated region
      $region13: #{tpu_custom_call.1} parent=5 // pred_check
        %p127 = pneg %p126
      $region14: #{tpu_custom_call.1} parent=5 // pred_check_branch
        %129 = sbr.rel (%p127) target = $region16
      $region15: #{tpu_custom_call.1} parent=5 // pred_region
        // Predicated region
        $region17: #{tpu_custom_call.1} parent=15 // pred_check
          %p130 = pneg %p51
        $region18: #{tpu_custom_call.1} parent=15 // pred_check_branch
          %132 = sbr.rel (%p130) target = $region20
        $region19: #{tpu_custom_call.1} parent=15 // pred_region
          %s133 = sand.u32 %s41, 1
          %s134 = scalar_lea.sflag [#allocation3], %s133
          %s135 = sand.u32 %s41, 1
          %s136 = smul.addr %s135, 8
          %s137 = scalar_lea.vmem [#allocation2], %s136
          %s138 = sadd.s32 %s24, %s25
          %s140 = ssub.s32 128, 128
          %141 = vsyncadd %s134, %s140
          %s142 = smul.addr %s138, 128
          %s143 = scalar_lea.hbm %s0, %s142
          %s145 = sshll.u32 %s137, 4
          %s146 = int_to_ptr.vmem [resolvable:$true] %s145
          %148 = dma.hbm_to_vmem [thread:$0]  %s143, 128, %s146, %s134
        $region20: #{tpu_custom_call.1} parent=15 // pred_fallthru
          _
        // Predicated region
        $region21: #{tpu_custom_call.1} parent=15 // pred_check
          %p149 = pneg %p79
        $region22: #{tpu_custom_call.1} parent=15 // pred_check_branch
          %151 = sbr.rel (%p149) target = $region24
        $region23: #{tpu_custom_call.1} parent=15 // pred_region
          %s152 = sand.u32 %s69, 1
          %s153 = scalar_lea.sflag [#allocation6], %s152
          %s154 = sand.u32 %s69, 1
          %s155 = smul.addr %s154, 8
          %s156 = scalar_lea.vmem [#allocation5], %s155
          %s157 = sadd.s32 %s24, %s25
          %s159 = ssub.s32 128, 128
          %160 = vsyncadd %s153, %s159
          %s161 = smul.addr %s157, 128
          %s162 = scalar_lea.hbm %s1, %s161
          %s164 = sshll.u32 %s156, 4
          %s165 = int_to_ptr.vmem [resolvable:$true] %s164
          %167 = dma.hbm_to_vmem [thread:$0]  %s162, 128, %s165, %s153
        $region24: #{tpu_custom_call.1} parent=15 // pred_fallthru
          _
      $region16: #{tpu_custom_call.1} parent=5 // pred_fallthru
        _
      %p168 = scmp.le.s32.totalorder 1, %s17
      %p169 = scmp.lt.s32.totalorder %s17, 3
      %p170 = pnand %p168, %p169
      %p171 = pneg %p170
      // Predicated region
      $region25: #{tpu_custom_call.1} parent=5 // pred_check
        _
      $region26: #{tpu_custom_call.1} parent=5 // pred_check_branch
        %173 = sbr.rel (%p170) target = $region28
      $region27: #{tpu_custom_call.1} parent=5 // pred_region
        %s174 = ssub.s32 %s17, 1
        %s175 = sand.u32 %s44, 1
        %s176 = scalar_lea.sflag [#allocation3], %s175
        %s177 = sand.u32 %s44, 1
        %s178 = smul.addr %s177, 8
        %s179 = scalar_lea.vmem [#allocation2], %s178
        // Predicated region
        $region29: #{tpu_custom_call.1} parent=27 // pred_check
          %p180 = pneg %p57
        $region30: #{tpu_custom_call.1} parent=27 // pred_check_branch
          %182 = sbr.rel (%p180) target = $region32
        $region31: #{tpu_custom_call.1} parent=27 // pred_region
          %183 = dma.done %s176, 128
        $region32: #{tpu_custom_call.1} parent=27 // pred_fallthru
          _
        %s184 = sand.u32 %s72, 1
        %s185 = scalar_lea.sflag [#allocation6], %s184
        %s186 = sand.u32 %s72, 1
        %s187 = smul.addr %s186, 8
        %s188 = scalar_lea.vmem [#allocation5], %s187
        // Predicated region
        $region33: #{tpu_custom_call.1} parent=27 // pred_check
          %p189 = pneg %p85
        $region34: #{tpu_custom_call.1} parent=27 // pred_check_branch
          %191 = sbr.rel (%p189) target = $region36
        $region35: #{tpu_custom_call.1} parent=27 // pred_region
          %192 = dma.done %s185, 128
        $region36: #{tpu_custom_call.1} parent=27 // pred_fallthru
          _
        %s193 = sand.u32 %s44, 1
        %s194 = scalar_lea.sflag [#allocation3], %s193
        %s195 = sand.u32 %s44, 1
        %s196 = smul.addr %s195, 8
        %s197 = scalar_lea.vmem [#allocation2], %s196
        %p198 = pneg %p57
        %p199 = pneg %p54
        %s200 = sand.u32 %s72, 1
        %s201 = scalar_lea.sflag [#allocation6], %s200
        %s202 = sand.u32 %s72, 1
        %s203 = smul.addr %s202, 8
        %s204 = scalar_lea.vmem [#allocation5], %s203
        %p205 = pneg %p85
        %p206 = pneg %p82
        %p207 = pneg %p111
        %p208 = pneg %p108
        %s209 = sand.u32 %s98, 1
        %s210 = scalar_lea.sflag [#allocation4], %s209
        %s211 = sand.u32 %s98, 1
        %s212 = scalar_lea.vmem [#allocation7], %s211
        %s213 = sadd.s32 %s26, %s27
        %s214 = sadd.s32 %s26, %s27
        %p215 = scmp.eq.s32.totalorder %s27, 0
        // Predicated region
        $region37: #{tpu_custom_call.1} parent=27 // pred_check
          %p216 = pneg %p215
        $region38: #{tpu_custom_call.1} parent=27 // pred_check_branch
          %218 = sbr.rel (%p216) target = $region40
        $region39: #{tpu_custom_call.1} parent=27 // pred_region
          %219 = vst [vmem:[%s212] sm:$0x1] 0.0
        $region40: #{tpu_custom_call.1} parent=27 // pred_fallthru
          _
        %v220 = vld [vmem:[%s179] sm:$0xff]
        %v221 = vld [vmem:[%s188] sm:$0xff]
        %v222 = vmul.f32 %v220, %v221
        %223 = vadd.xlane.f32.xlu0 %v222
        %v224 = vpop.xlane.xlu0 %223
        %v225 = vmul.f32 %v220, %v220
        %226 = vadd.xlane.f32.xlu0 %v225
        %v227 = vpop.xlane.xlu0 %226
        %v228 = vmul.f32 %v221, %v221
        %229 = vadd.xlane.f32.xlu0 %v228
        %v230 = vpop.xlane.xlu0 %229
        %v231 = vmax.f32 %v227, 1e-16
        %v232 = vrsqrt.pop %v231
        %v233 = vmul.f32 %v224, %v232
        %v234 = vmax.f32 %v230, 1e-16
        %v235 = vrsqrt.pop %v234
        %v236 = vmul.f32 %v233, %v235
        %s237 = sadd.s32 %s26, %s27
        %s238 = smul.u32 %s237, 8
        %v239 = vlaneseq
        %v240 = vshrl.u32 %v239, 7
        %v241 = vstv %s238
        %v242 = vadd.s32 %v241, %v240
        %vm243 = vcmp.lt.s32.totalorder %v242, 8
        %v244 = vsel %vm243, %v236, 0.0
        %v245 = vrot.slane %v244, 4
        %v246 = vadd.f32 %v244, %v245
        %v247 = vrot.slane %v246, 2
        %v248 = vadd.f32 %v246, %v247
        %v249 = vrot.slane %v248, 1
        %v250 = vadd.f32 %v248, %v249
        %v251 = vld [vmem:[%s212] sm:$0x1]
        %v252 = vadd.f32 %v251, %v250
        %253 = vst [vmem:[%s212] sm:$0x1] %v252
        %s254 = sand.u32 %s98, 1
        %s255 = scalar_lea.sflag [#allocation4], %s254
        %s256 = sand.u32 %s98, 1
        %s257 = scalar_lea.vmem [#allocation7], %s256
        // Predicated region
        $region41: #{tpu_custom_call.1} parent=27 // pred_check
          %p258 = pneg %p108
        $region42: #{tpu_custom_call.1} parent=27 // pred_check_branch
          %260 = sbr.rel (%p258) target = $region44
        $region43: #{tpu_custom_call.1} parent=27 // pred_region
          %s262 = ssub.s32 16, 16
          %263 = vsyncadd %s255, %s262
          %s264 = smul.addr %s26, 16
          %s265 = scalar_lea.hbm %s2, %s264
          %s267 = sshll.u32 %s257, 4
          %s268 = int_to_ptr.vmem [resolvable:$true] %s267
          %270 = dma.vmem_to_hbm [thread:$0]  %s268, 16, %s265, %s255
        $region44: #{tpu_custom_call.1} parent=27 // pred_fallthru
          _
      $region28: #{tpu_custom_call.1} parent=5 // pred_fallthru
        _
      %p271 = scmp.le.s32.totalorder 2, %s17
      // Predicated region
      $region45: #{tpu_custom_call.1} parent=5 // pred_check
        %p272 = pneg %p271
      $region46: #{tpu_custom_call.1} parent=5 // pred_check_branch
        %274 = sbr.rel (%p272) target = $region48
      $region47: #{tpu_custom_call.1} parent=5 // pred_region
        %s275 = ssub.s32 %s17, 2
        // Predicated region
        $region49: #{tpu_custom_call.1} parent=47 // pred_check
          %p276 = pneg %p114
        $region50: #{tpu_custom_call.1} parent=47 // pred_check_branch
          %278 = sbr.rel (%p276) target = $region52
        $region51: #{tpu_custom_call.1} parent=47 // pred_region
          %s279 = sand.u32 %s99, 1
          %s280 = scalar_lea.sflag [#allocation4], %s279
          %s281 = sand.u32 %s99, 1
          %s282 = scalar_lea.vmem [#allocation7], %s281
          %283 = dma.done %s280, 16
        $region52: #{tpu_custom_call.1} parent=47 // pred_fallthru
          _
      $region48: #{tpu_custom_call.1} parent=5 // pred_fallthru
        _
    $region6: #{tpu_custom_call.1} parent=1 // loop_footer
      %s21 = sadd.s32 1, %s17
    $region7: #{tpu_custom_call.1} parent=1 // loop_footer_branch
      %16 = sbr.rel target = $region3
    $region8: #{tpu_custom_call.1} parent=1 // loop_exit
      _
    %284 = vsyncpa [#allocation3], 1
    %s285 = scalar_lea.sflag [#allocation3], 1
    %286 = vsyncpa %s285, 1
    %287 = vsyncpa [#allocation6], 1
    %s288 = scalar_lea.sflag [#allocation6], 1
    %289 = vsyncpa %s288, 1
    %290 = vsyncpa [#allocation4], 1
    %s291 = scalar_lea.sflag [#allocation4], 1
    %292 = vsyncpa %s291, 1

</llo_original>
